<compile_context>
chip_gen: v6e
topology: v6e:2x2x1
jax: 0.10.0
libtpu: 0.0.40
codegen_flags: <defaults>
</compile_context>

<pallas_src>
import functools

import numpy as np
import jax
import jax.numpy as jnp
from jax.experimental import pallas as pl
from jax.experimental.pallas import tpu as pltpu

PAD_IDX, SOS_IDX, EOS_IDX = 0, 1, 2
NEG_INF = -1e30                      # plain python float (NOT a jnp scalar) — safe to close over
VMEM_LIMIT = 32 * 1024 * 1024        # explicit scoped-VMEM budget, valid on v5e/v6e/v7x


def _row_tile(m):
    for t in (256, 128, 64, 32, 16, 8):
        if m % t == 0:
            return t
    return m


def _vocab_tile(v):
    if v <= 512:
        return v
    for t in (512, 256, 128):        # 256-multiples preferred for v6e/v7x MXU
        if v % t == 0:
            return t
    return v


def _softmax_last(x):
    m = jnp.max(x, axis=-1, keepdims=True)
    e = jnp.exp(x - m)
    return e / jnp.sum(e, axis=-1, keepdims=True)


# ----------------------------------------------------------------------------- generic linear kernel
def linear_kernel(x_ref, w_ref, b_ref, o_ref, *, activation):
    y = jnp.dot(x_ref[...], w_ref[...], preferred_element_type=jnp.float32) + b_ref[...]
    if activation == "tanh":
        y = jnp.tanh(y)
    o_ref[...] = y


def pallas_linear(x, w, b, activation=None):
    M, K = x.shape
    N = w.shape[1]
    tm = _row_tile(M)
    return pl.pallas_call(
        functools.partial(linear_kernel, activation=activation),
        out_shape=jax.ShapeDtypeStruct((M, N), jnp.float32),
        grid=(M // tm,),
        in_specs=[pl.BlockSpec((tm, K), lambda i: (i, 0)),
                  pl.BlockSpec((K, N), lambda i: (0, 0)),
                  pl.BlockSpec((1, N), lambda i: (0, 0))],
        out_specs=pl.BlockSpec((tm, N), lambda i: (i, 0)),
        compiler_params=pltpu.CompilerParams(
            dimension_semantics=("parallel",), vmem_limit_bytes=VMEM_LIMIT),
    )(x, w, b.reshape(1, -1))


# ----------------------------------------------------------------------------- decoder core kernel
def decode_core_kernel(emb_ref, h_ref, c_ref, keys_txt_ref, mask_txt_ref, keys_vis_ref,
                       wq_txt_ref, wq_vis_ref, w_lstm_ref, b_lstm_ref,
                       h_new_ref, c_new_ref, *, hidden_size):
    emb = emb_ref[...]            # [BB, E]
    h = h_ref[...]                # [BB, H]
    c = c_ref[...]                # [BB, H]
    keys_txt = keys_txt_ref[...]  # [BB, S, H]
    keys_vis = keys_vis_ref[...]  # [BB, G, H]

    # ---- textual attention: all contractions as batched matmuls -> MXU ----
    q_txt = jnp.dot(h, wq_txt_ref[...], preferred_element_type=jnp.float32)            # [BB,H]
    s_txt = jnp.einsum("bsh,bkh->bsk", keys_txt, q_txt[:, None, :],
                       preferred_element_type=jnp.float32)[:, :, 0]                    # [BB,S]
    s_txt = jnp.where(mask_txt_ref[...] > 0, s_txt, NEG_INF)
    a_txt = _softmax_last(s_txt)
    ctx_txt = jnp.einsum("bks,bsh->bkh", a_txt[:, None, :], keys_txt,
                         preferred_element_type=jnp.float32)[:, 0, :]                  # [BB,H]

    # ---- visual attention ----
    q_vis = jnp.dot(h, wq_vis_ref[...], preferred_element_type=jnp.float32)
    s_vis = jnp.einsum("bgh,bkh->bgk", keys_vis, q_vis[:, None, :],
                       preferred_element_type=jnp.float32)[:, :, 0]                    # [BB,G]
    a_vis = _softmax_last(s_vis)
    ctx_vis = jnp.einsum("bkg,bgh->bkh", a_vis[:, None, :], keys_vis,
                         preferred_element_type=jnp.float32)[:, 0, :]                  # [BB,H]

    # ---- LSTM cell: one fused matmul instead of 4 small ones ----
    x_cat = jnp.concatenate([emb, ctx_txt, ctx_vis, h], axis=-1)                       # [BB,E+3H]
    gates = jnp.dot(x_cat, w_lstm_ref[...], preferred_element_type=jnp.float32) + b_lstm_ref[...]
    H = hidden_size
    i_g = jax.nn.sigmoid(gates[:, 0:H])
    f_g = jax.nn.sigmoid(gates[:, H:2 * H])
    g_g = jnp.tanh(gates[:, 2 * H:3 * H])
    o_g = jax.nn.sigmoid(gates[:, 3 * H:4 * H])
    c_new = f_g * c + i_g * g_g
    h_new = o_g * jnp.tanh(c_new)

    h_new_ref[...] = h_new
    c_new_ref[...] = c_new


def decode_core(emb, h, c, keys_txt, mask_txt, keys_vis, wq_txt, wq_vis, w_lstm, b_lstm):
    BB, H = h.shape
    vmem = pl.BlockSpec(memory_space=pltpu.MemorySpace.VMEM)
    return pl.pallas_call(
        functools.partial(decode_core_kernel, hidden_size=H),
        out_shape=(jax.ShapeDtypeStruct((BB, H), jnp.float32),
                   jax.ShapeDtypeStruct((BB, H), jnp.float32)),
        in_specs=[vmem] * 10,
        out_specs=(vmem, vmem),
        compiler_params=pltpu.CompilerParams(vmem_limit_bytes=VMEM_LIMIT),
    )(emb, h, c, keys_txt, mask_txt, keys_vis, wq_txt, wq_vis, w_lstm, b_lstm)


# ----------------------------------------------------------------------------- vocab-tiled softmax
def vocab_stats_kernel(h_ref, w_ref, b_ref, m_ref, lb_ref, la_ref, *, tn, force_align):
    # Online (flash-style) accumulation of max / sum-exp / masked sum-exp over vocab tiles.
    j = pl.program_id(0)

    @pl.when(j == 0)
    def _():
        m_ref[...] = jnp.full_like(m_ref, NEG_INF)
        lb_ref[...] = jnp.zeros_like(lb_ref)
        la_ref[...] = jnp.zeros_like(la_ref)

    logits = jnp.dot(h_ref[...], w_ref[...], preferred_element_type=jnp.float32) + b_ref[...]
    col = j * tn + jax.lax.broadcasted_iota(jnp.int32, logits.shape, 1)
    bad = (col == PAD_IDX) | (col == SOS_IDX)
    if force_align:
        bad = bad | (col == EOS_IDX)

    m_prev = m_ref[...]
    m_new = jnp.maximum(m_prev, jnp.max(logits, axis=-1, keepdims=True))
    scale = jnp.exp(m_prev - m_new)
    e = jnp.exp(logits - m_new)
    lb_ref[...] = lb_ref[...] * scale + jnp.sum(e, axis=-1, keepdims=True)
    la_ref[...] = la_ref[...] * scale + jnp.sum(jnp.where(bad, 0.0, e), axis=-1, keepdims=True)
    m_ref[...] = m_new


def vocab_probs_kernel(h_ref, w_ref, b_ref, m_ref, lb_ref, la_ref,
                       before_ref, after_ref, logp_ref, *, tn, force_align):
    j = pl.program_id(0)
    logits = jnp.dot(h_ref[...], w_ref[...], preferred_element_type=jnp.float32) + b_ref[...]
    col = j * tn + jax.lax.broadcasted_iota(jnp.int32, logits.shape, 1)
    bad = (col == PAD_IDX) | (col == SOS_IDX)
    if force_align:
        bad = bad | (col == EOS_IDX)

    shifted = logits - m_ref[...]
    e = jnp.exp(shifted)                                     # single exp pass for this tile
    inv_lb = pl.reciprocal(lb_ref[...], approx=True)         # EUP, frees VALU divides
    inv_la = pl.reciprocal(la_ref[...], approx=True)
    before_ref[...] = e * inv_lb
    after_ref[...] = jnp.where(bad, 0.0, e) * inv_la
    logp_ref[...] = jnp.where(bad, NEG_INF, shifted - jnp.log(la_ref[...]))


def vocab_softmax(h_new, w_out, b_out, *, force_align):
    BB, H = h_new.shape
    V = w_out.shape[1]
    tn = _vocab_tile(V)
    nv = V // tn
    small = pl.BlockSpec((BB, 1), lambda j: (0, 0))
    w_spec = pl.BlockSpec((H, tn), lambda j: (0, j))
    b_spec = pl.BlockSpec((1, tn), lambda j: (0, j))
    h_spec = pl.BlockSpec((BB, H), lambda j: (0, 0))

    # pass 1: per-row softmax statistics (m, sum_exp, masked sum_exp), accumulated across V tiles
    m_stat, lb_stat, la_stat = pl.pallas_call(
        functools.partial(vocab_stats_kernel, tn=tn, force_align=force_align),
        out_shape=tuple(jax.ShapeDtypeStruct((BB, 1), jnp.float32) for _ in range(3)),
        grid=(nv,),
        in_specs=[h_spec, w_spec, b_spec],
        out_specs=(small, small, small),
        compiler_params=pltpu.CompilerParams(
            dimension_semantics=("arbitrary",), vmem_limit_bytes=VMEM_LIMIT),
    )(h_new, w_out, b_out)

    # pass 2: normalized before / after / log-prob tiles (independent per V tile -> parallel)
    before, after, logp = pl.pallas_call(
        functools.partial(vocab_probs_kernel, tn=tn, force_align=force_align),
        out_shape=tuple(jax.ShapeDtypeStruct((BB, V), jnp.float32) for _ in range(3)),
        grid=(nv,),
        in_specs=[h_spec, w_spec, b_spec, small, small, small],
        out_specs=tuple(pl.BlockSpec((BB, tn), lambda j: (0, j)) for _ in range(3)),
        compiler_params=pltpu.CompilerParams(
            dimension_semantics=("parallel",), vmem_limit_bytes=VMEM_LIMIT),
    )(h_new, w_out, b_out, m_stat, lb_stat, la_stat)
    return before, after, logp


# ----------------------------------------------------------------------------- synthetic model params
def init_params(key, vocab, emb, hidden, sit_dim):
    ks = jax.random.split(key, 14)

    def w(k, shape, scale=0.1):
        return (scale * jax.random.normal(k, shape)).astype(jnp.float32)

    return dict(
        emb_in=w(ks[0], (vocab, emb)),
        emb_out=w(ks[1], (vocab, emb)),
        w_enc=w(ks[2], (emb, hidden)), b_enc=jnp.zeros((hidden,), jnp.float32),
        w_sit=w(ks[3], (sit_dim, hidden)), b_sit=jnp.zeros((hidden,), jnp.float32),
        wk_vis=w(ks[4], (hidden, hidden)), bk_vis=jnp.zeros((hidden,), jnp.float32),
        wk_txt=w(ks[5], (hidden, hidden)), bk_txt=jnp.zeros((hidden,), jnp.float32),
        w_e2d=w(ks[6], (hidden, hidden)), b_e2d=jnp.zeros((hidden,), jnp.float32),
        wq_txt=w(ks[7], (hidden, hidden)),
        wq_vis=w(ks[8], (hidden, hidden)),
        w_ie=w(ks[9], (emb, 4 * hidden)),
        w_it=w(ks[10], (hidden, 4 * hidden)),
        w_iv=w(ks[11], (hidden, 4 * hidden)),
        w_hh=w(ks[12], (hidden, 4 * hidden)),
        b_lstm=jnp.zeros((1, 4 * hidden), jnp.float32),
        w_out=w(ks[13], (hidden, vocab)),
        b_out=jnp.zeros((1, vocab), jnp.float32),
    )


def encode_input(params, commands_input, commands_lengths, situations_input):
    B, S = commands_input.shape
    E = params["emb_in"].shape[1]
    H = params["w_enc"].shape[1]
    cmd_emb = params["emb_in"][commands_input]                                   # [B,S,E]
    enc = pallas_linear(cmd_emb.reshape(B * S, E), params["w_enc"], params["b_enc"], "tanh")
    enc = enc.reshape(B, S, H)
    mask = (jnp.arange(S)[None, :] < commands_lengths[:, None]).astype(jnp.float32)
    hidden_states = (enc * mask[:, :, None]).sum(1) / jnp.maximum(
        commands_lengths[:, None].astype(jnp.float32), 1.0)
    encoder_outputs = jnp.transpose(enc, (1, 0, 2))                              # [S,B,H]
    Bs, G, C = situations_input.shape
    enc_sit = pallas_linear(situations_input.reshape(Bs * G, C),
                            params["w_sit"], params["b_sit"], "tanh").reshape(Bs, G, H)
    return {"encoded_commands": {"encoder_outputs": encoder_outputs},
            "hidden_states": hidden_states,
            "encoded_situations": enc_sit}


# ----------------------------------------------------------------------------- full forward
def sequence_generator_stat_forward(params, batch_data, beam_size, max_length,
                                    required_length_list=(), force_align=True):
    (input_sequence, input_lengths, _deriv, situation, _sitspec,
     target_sequence, _tlens, _apos, _tpos) = batch_data
    input_lengths = jnp.asarray(input_lengths, dtype=jnp.int32)
    batch_size, _ = input_sequence.shape
    target_len = target_sequence.shape[1]
    # one host copy of the targets up-front: all per-step pad/sos/eos checks are host-side after this
    target_np = np.asarray(jax.device_get(target_sequence))

    encoded_input = encode_input(params, input_sequence, input_lengths, situation)
    H = params["w_enc"].shape[1]

    enc_sit = encoded_input["encoded_situations"]                                # [B,G,H]
    B, G, _ = enc_sit.shape
    projected_keys_visual = pallas_linear(enc_sit.reshape(B * G, H),
                                          params["wk_vis"], params["bk_vis"]).reshape(B, G, H)
    enc_cmd = encoded_input["encoded_commands"]["encoder_outputs"]               # [S,B,H]
    S = enc_cmd.shape[0]
    projected_keys_textual = pallas_linear(enc_cmd.reshape(S * B, H),
                                           params["wk_txt"], params["bk_txt"]).reshape(S, B, H)

    dec_h0 = pallas_linear(encoded_input["hidden_states"], params["w_e2d"], params["b_e2d"], "tanh")
    hidden = (dec_h0[None, :, :], jnp.zeros_like(dec_h0)[None, :, :])            # (1,B,H)

    new_order = jnp.repeat(jnp.arange(batch_size), beam_size)                    # [BB]
    BB = batch_size * beam_size
    new_hidden = (hidden[0][:, new_order], hidden[1][:, new_order])
    new_projected_keys_textual = projected_keys_textual[:, new_order]            # [S,BB,H]
    new_projected_keys_visual = projected_keys_visual[new_order]                 # [BB,G,H]
    new_input_lengths = input_lengths[new_order]

    generated_tokens = jnp.full((BB, max_length + 1), SOS_IDX, dtype=jnp.int32)
    scores = jnp.zeros((BB, max_length + 1), dtype=jnp.float32)
    bbsz_offsets = (jnp.arange(batch_size) * beam_size)[:, None]                 # [B,1]
    final_scores = jnp.zeros((BB,), dtype=jnp.float32)
    decode_dict = {}
    gt_before = [[] for _ in range(batch_size)]
    gt_after = [[] for _ in range(batch_size)]
    gt_records = []   # (valid_mask[np bool B], before[B] device, after[B] device) per step

    keys_txt_bb = jnp.transpose(new_projected_keys_textual, (1, 0, 2))           # [BB,S,H]
    mask_txt = (jnp.arange(S)[None, :] < new_input_lengths[:, None]).astype(jnp.float32)

    # loop-invariant fused LSTM weight (built once, outside the step loop)
    w_lstm_fused = jnp.concatenate(
        [params["w_ie"], params["w_it"], params["w_iv"], params["w_hh"]], axis=0)
    batch_range = jnp.arange(batch_size)

    # TODO(synk): keys/weights are still re-streamed from HBM each decode step; keeping them VMEM
    # resident would require folding the beam-reorder bookkeeping into a single scanned kernel.
    for position in range(max_length):
        if position > target_len - 2:
            break
        tok = generated_tokens[:, position]
        emb = params["emb_out"][tok]
        h = new_hidden[0][0]
        c = new_hidden[1][0]

        h_new, c_new = decode_core(emb, h, c, keys_txt_bb, mask_txt, new_projected_keys_visual,
                                   params["wq_txt"], params["wq_vis"],
                                   w_lstm_fused, params["b_lstm"])
        before_probs, after_probs, log_probs = vocab_softmax(
            h_new, params["w_out"], params["b_out"], force_align=force_align)
        hidden = (h_new[None], c_new[None])

        # ---- ground-truth prob collection (device-side gather, no per-step host sync) ----
        gt_col = target_np[:, position + 1]
        valid = ~np.isin(gt_col, [PAD_IDX, SOS_IDX, EOS_IDX])
        if valid.any():
            before_r = before_probs.reshape(batch_size, beam_size, -1)
            after_r = after_probs.reshape(batch_size, beam_size, -1)
            idxs = jnp.asarray(gt_col, dtype=jnp.int32)
            gt_records.append((valid,
                               before_r[batch_range, 0, idxs],
                               after_r[batch_range, 0, idxs]))

        # ---- beam search (selection glue; top-k done with lax.top_k) ----
        vocab_num = log_probs.shape[-1]
        pp = log_probs.reshape(batch_size, beam_size, vocab_num)
        if position == 0:
            pp = pp[:, ::beam_size, :]
        else:
            pp = pp + scores.reshape(batch_size, beam_size, -1)[:, :, position - 1][:, :, None]
        top_scores, top_indices = jax.lax.top_k(pp.reshape(batch_size, -1), beam_size)
        beam_idx = top_indices // vocab_num
        word_idx = top_indices % vocab_num

        cand_bbsz_idx = (beam_idx + bbsz_offsets).reshape(-1)
        generated_tokens = generated_tokens[cand_bbsz_idx]
        generated_tokens = generated_tokens.at[:, position + 1].set(
            word_idx.reshape(-1).astype(jnp.int32))
        new_hidden = (hidden[0][:, cand_bbsz_idx], hidden[1][:, cand_bbsz_idx])
        if position + 1 in required_length_list:
            decode_dict[position + 1] = generated_tokens[:, 1:position + 2].reshape(
                batch_size, beam_size, -1)
        scores = scores.at[:, position].set(top_scores.reshape(-1))
        final_scores = scores[:, position + 1]   # mirrors the reference exactly (reads next column)
        finished_flag = generated_tokens[:, position + 1] == EOS_IDX
        # single scalar host sync per step — required by the reference's data-dependent break
        if bool(jnp.all(finished_flag)):
            break
        if position >= max_length:
            break

    # assemble ground-truth stat lists with one host transfer
    if gt_records:
        fetched = jax.device_get([(b, a) for _, b, a in gt_records])
        for (valid, _, _), (b_host, a_host) in zip(gt_records, fetched):
            for idx in range(batch_size):
                if valid[idx]:
                    gt_before[idx].append(float(b_host[idx]))
                    gt_after[idx].append(float(a_host[idx]))

    batch_scores = final_scores.reshape(batch_size, beam_size)
    best_beam = jnp.argmax(batch_scores, axis=-1)
    generated_tokens = generated_tokens.reshape(batch_size, beam_size, -1)
    best_sentences = jnp.take_along_axis(
        generated_tokens, best_beam[:, None, None], axis=1)[:, 0, :]
    return best_sentences[:, 1:], decode_dict, gt_before, gt_after


# ----------------------------------------------------------------------------- demo
if __name__ == "__main__":
    key = jax.random.PRNGKey(0)
    batch_size, beam_size = 2, 3
    seq_len, hidden, emb = 8, 32, 32
    vocab, sit_dim, grid_cells = 16, 8, 16
    max_length = 6
    target_len = 7

    kp, k1, k2, k3 = jax.random.split(key, 4)
    params = init_params(kp, vocab, emb, hidden, sit_dim)

    input_sequence = jax.random.randint(k1, (batch_size, seq_len), 3, vocab, dtype=jnp.int32)
    input_lengths = [seq_len, seq_len - 2]
    input_sequence = input_sequence.at[1, seq_len - 2:].set(PAD_IDX)
    situation = jax.random.normal(k2, (batch_size, grid_cells, sit_dim), dtype=jnp.float32)
    target_sequence = jax.random.randint(k3, (batch_size, target_len), 3, vocab, dtype=jnp.int32)
    target_sequence = target_sequence.at[:, 0].set(SOS_IDX)

    # (input_sequence, input_lengths, derivation_spec, situation, situation_spec,
    #  target_sequence, target_lengths, agent_positions, target_positions)
    batch_data = (input_sequence, input_lengths, None, situation, None,
                  target_sequence, None, None, None)

    best_sentences, decode_dict, gt_before, gt_after = sequence_generator_stat_forward(
        params, batch_data, beam_size, max_length, required_length_list=(), force_align=True)
    jax.block_until_ready(best_sentences)
    # TODO(synk): the external `model` in the reference is unspecified; a deterministic synthetic
    # encoder/attention-LSTM with the same interfaces & shapes is used instead of a checkpoint.
    print("KERNEL_OK")
</pallas_src>

<mosaic_0001>
module attributes {stable_mosaic.version = 11 : i64} {
  func.func @linear_kernel(%arg0: i32, %arg1: memref<16x32xf32, #tpu.memory_space<vmem>>, %arg2: memref<32x32xf32, #tpu.memory_space<vmem>>, %arg3: memref<1x32xf32, #tpu.memory_space<vmem>>, %arg4: memref<16x32xf32, #tpu.memory_space<vmem>>) attributes {dimension_semantics = [#tpu.dimension_semantics<parallel>], iteration_bounds = array<i64: 1>, scalar_prefetch = 0 : i64, scratch_operands = 0 : i64, tpu.core_type = #tpu.core_type<tc>, window_params = [{transform_indices = @transform_0, window_bounds = array<i64: 16, 32>}, {pipeline_mode = #tpu.pipeline_mode<synchronous>, transform_indices = @transform_1, window_bounds = array<i64: 32, 32>}, {pipeline_mode = #tpu.pipeline_mode<synchronous>, transform_indices = @transform_2, window_bounds = array<i64: 1, 32>}, {transform_indices = @transform_3, window_bounds = array<i64: 16, 32>}]} {
    %c0 = arith.constant 0 : index
    %c0_0 = arith.constant 0 : index
    %0 = vector.load %arg1[%c0, %c0_0] : memref<16x32xf32, #tpu.memory_space<vmem>>, vector<16x32xf32>
    %c0_1 = arith.constant 0 : index
    %c0_2 = arith.constant 0 : index
    %1 = vector.load %arg2[%c0_1, %c0_2] : memref<32x32xf32, #tpu.memory_space<vmem>>, vector<32x32xf32>
    %cst = arith.constant dense<0.000000e+00> : vector<16x32xf32>
    %2 = tpu.matmul %0, %1, %cst {dimension_numbers = #tpu.dot_dimension_numbers<[1], [0], [0], [1], [0, 0, 1, 1], [], []>} : vector<16x32xf32>, vector<32x32xf32>, vector<16x32xf32> -> vector<16x32xf32>
    %c0_3 = arith.constant 0 : index
    %c0_4 = arith.constant 0 : index
    %3 = vector.load %arg3[%c0_3, %c0_4] : memref<1x32xf32, #tpu.memory_space<vmem>>, vector<1x32xf32>
    %4 = vector.broadcast %3 : vector<1x32xf32> to vector<16x32xf32>
    %5 = arith.addf %2, %4 : vector<16x32xf32>
    %6 = math.tanh %5 : vector<16x32xf32>
    %c0_5 = arith.constant 0 : index
    %c0_6 = arith.constant 0 : index
    %7 = vector.load %arg4[%c0_5, %c0_6] : memref<16x32xf32, #tpu.memory_space<vmem>>, vector<16x32xf32>
    tpu.vector_store %arg4[%c0_5, %c0_6], %6 {strides = array<i32>} : memref<16x32xf32, #tpu.memory_space<vmem>>, vector<16x32xf32>,
    return
  }
  func.func @transform_0(%arg0: i32) -> (i32, i32) {
    %c0_i32 = arith.constant 0 : i32
    %c0_i32_0 = arith.constant 0 : i32
    return %arg0, %c0_i32 : i32, i32
  }
  func.func @transform_1(%arg0: i32) -> (i32, i32) {
    %c0_i32 = arith.constant 0 : i32
    %c0_i32_0 = arith.constant 0 : i32
    %c0_i32_1 = arith.constant 0 : i32
    return %c0_i32, %c0_i32_0 : i32, i32
  }
  func.func @transform_2(%arg0: i32) -> (i32, i32) {
    %c0_i32 = arith.constant 0 : i32
    %c0_i32_0 = arith.constant 0 : i32
    %c0_i32_1 = arith.constant 0 : i32
    return %c0_i32, %c0_i32_0 : i32, i32
  }
  func.func @transform_3(%arg0: i32) -> (i32, i32) {
    %c0_i32 = arith.constant 0 : i32
    %c0_i32_0 = arith.constant 0 : i32
    return %arg0, %c0_i32 : i32, i32
  }
}

</mosaic_0001>

<llo_original>
// kernel: tpu_custom_call.1
$region0: #{tpu_custom_call.1}
  #allocation0 [shape = 'u32[]', space=smem, size = 0x4, offset = 0x4, fixed_abs, tag = 'smem constant byte address 0x4 - core index']
  #allocation1 [shape = 'u32[144,128]{1,0:T(1,128)}', space=vmem, size = 0x12000, scoped, tag = 'internal scratch']
  %s0 = inlined_call_operand.hbm [shape: f32[16,32], index: 0, kind: input, shape index: {}]
  %s1 = inlined_call_operand.hbm [shape: f32[32,32], index: 1, kind: input, shape index: {}]
  %s2 = inlined_call_operand.vmem [shape: f32[1,32], index: 2, kind: input, shape index: {}]
  %s3 = inlined_call_operand.hbm [shape: f32[16,32], index: 3, kind: output, shape index: {}]
  %s4 = sld [smem:[#allocation0]]
  $region30: #{tpu_custom_call.1} parent=0
    _
  %s6 = ssub.s32 1, %s4
  %s7 = scalar_select 0, %s6, %s4
  $region1: #{tpu_custom_call.1} parent=0
    #allocation2 [shape = 'u8[8192]{0}', space=vmem, size = 0x2000, scoped, tag = 'input window, operand 0, single buffered']
    #allocation3 [shape = 's32[1]{0}', space=sflag, size = 0x4, scoped, tag = 'scoped memory for tpu_custom_call.1']
    #allocation4 [shape = 's32[1]{0}', space=sflag, size = 0x4, scoped, tag = 'scoped memory for tpu_custom_call.1']
    #allocation5 [shape = 'u8[16384]{0}', space=vmem, size = 0x4000, scoped, tag = 'input window, operand 1, single buffered']
    #allocation6 [shape = 's32[1]{0}', space=sflag, size = 0x4, scoped, tag = 'scoped memory for tpu_custom_call.1']
    #allocation7 [shape = 'u8[8192]{0}', space=vmem, size = 0x2000, scoped, tag = 'output window, operand 0, single buffered']
    %8 = vsyncpa [#allocation3], 0
    %9 = vsyncpa [#allocation6], 0
    %10 = vsyncpa [#allocation4], 0
    // Predicated region
    $region2: #{tpu_custom_call.1} parent=1 // pred_check
      _
    $region3: #{tpu_custom_call.1} parent=1 // pred_check_branch
      %12 = sbr.rel (0) target = $region5
    $region4: #{tpu_custom_call.1} parent=1 // pred_region
      %s14 = ssub.s32 256, 256
      %15 = vsyncadd [#allocation3], %s14
      %s16 = sshll.u32 [#allocation2], 4
      %s17 = int_to_ptr.vmem [resolvable:$true] %s16
      %22 = dma.hbm_to_vmem [thread:$0]  %s0, 256, %s17, [#allocation3], 128, 128, 8
    $region5: #{tpu_custom_call.1} parent=1 // pred_fallthru
      _
    // Predicated region
    $region6: #{tpu_custom_call.1} parent=1 // pred_check
      _
    $region7: #{tpu_custom_call.1} parent=1 // pred_check_branch
      %24 = sbr.rel (0) target = $region9
    $region8: #{tpu_custom_call.1} parent=1 // pred_region
      %s26 = ssub.s32 512, 512
      %27 = vsyncadd [#allocation6], %s26
      %s28 = sshll.u32 [#allocation5], 4
      %s29 = int_to_ptr.vmem [resolvable:$true] %s28
      %34 = dma.hbm_to_vmem [thread:$0]  %s1, 512, %s29, [#allocation6], 128, 128, 8
    $region9: #{tpu_custom_call.1} parent=1 // pred_fallthru
      _
    // Predicated region
    $region10: #{tpu_custom_call.1} parent=1 // pred_check
      _
    $region11: #{tpu_custom_call.1} parent=1 // pred_check_branch
      %36 = sbr.rel (0) target = $region13
    $region12: #{tpu_custom_call.1} parent=1 // pred_region
      _
    $region13: #{tpu_custom_call.1} parent=1 // pred_fallthru
      _
    // Predicated region
    $region14: #{tpu_custom_call.1} parent=1 // pred_check
      _
    $region15: #{tpu_custom_call.1} parent=1 // pred_check_branch
      %38 = sbr.rel (0) target = $region17
    $region16: #{tpu_custom_call.1} parent=1 // pred_region
      %39 = dma.done [#allocation3], 256
    $region17: #{tpu_custom_call.1} parent=1 // pred_fallthru
      _
    // Predicated region
    $region18: #{tpu_custom_call.1} parent=1 // pred_check
      _
    $region19: #{tpu_custom_call.1} parent=1 // pred_check_branch
      %41 = sbr.rel (0) target = $region21
    $region20: #{tpu_custom_call.1} parent=1 // pred_region
      %42 = dma.done [#allocation6], 512
    $region21: #{tpu_custom_call.1} parent=1 // pred_fallthru
      _
    %v43 = vld [vmem:[#allocation2] sm:$0xff]
    %v44 = vld [vmem:[#allocation2 + $0x8] sm:$0xff]
    %v45 = vld [vmem:[#allocation5] sm:$0xff]
    %v46 = vld [vmem:[#allocation5 + $0x8] sm:$0xff]
    %v47 = vld [vmem:[#allocation5 + $0x10] sm:$0xff]
    %v48 = vld [vmem:[#allocation5 + $0x18] sm:$0xff]
    %v49 = vld [vmem:[%s2] sm:$0x1]
    %v51 = vlaneseq
    %v52 = vshrl.u32 %v51, 7
    %v53 = vsub.s32 0, %v52
    %v54 = vrot.slane %v49, %v53
    %vm56 = vcmask 261120
    %v58 = vsel %vm56, %v43, 0
    %v61 = vsel %vm56, %v44, 0
    %63 = vmatprep.subr.mxu0 0.0
    %64 = vmatpush1.msra.mxu0 0.0
    %65 = vmatprep.subr.mxu0 0.0
    %66 = vmatpush1.msra.mxu0 0.0
    %67 = vmatprep.subr.mxu0 0.0
    %68 = vmatpush1.msra.mxu0 0.0
    %69 = vmatprep.subr.mxu0 0.0
    %70 = vmatpush1.msra.mxu0 0.0
    %71 = vmatprep.subr.mxu0 0.0
    %72 = vmatpush1.msra.mxu0 0.0
    %73 = vmatprep.subr.mxu0 0.0
    %74 = vmatpush1.msra.mxu0 0.0
    %75 = vmatprep.subr.mxu0 0.0
    %76 = vmatpush1.msra.mxu0 0.0
    %77 = vmatprep.subr.mxu0 0.0
    %78 = vmatpush1.msra.mxu0 0.0
    %79 = vmatprep.subr.mxu0 0.0
    %80 = vmatpush1.msra.mxu0 0.0
    %81 = vmatprep.subr.mxu0 0.0
    %82 = vmatpush1.msra.mxu0 0.0
    %83 = vmatprep.subr.mxu0 0.0
    %84 = vmatpush1.msra.mxu0 0.0
    %85 = vmatprep.subr.mxu0 0.0
    %86 = vmatpush1.msra.mxu0 0.0
    %87 = vmatprep.subr.mxu0 0.0
    %88 = vmatpush1.msra.mxu0 %v48
    %89 = vmatprep.subr.mxu0 0.0
    %90 = vmatpush1.msra.mxu0 %v47
    %91 = vmatprep.subr.mxu0 0.0
    %92 = vmatpush1.msra.mxu0 %v46
    %93 = vmatprep.subr.mxu0 0.0
    %94 = vmatpush1.msra.mxu0 %v45
    %95 = vmatprep.subr.mxu0 0.0
    %96 = vmatpush2.msra.mxu0 0.0
    %97 = vmatprep.subr.mxu0 0.0
    %98 = vmatpush2.msra.mxu0 0.0
    %99 = vmatprep.subr.mxu0 0.0
    %100 = vmatpush2.msra.mxu0 0.0
    %101 = vmatprep.subr.mxu0 0.0
    %102 = vmatpush2.msra.mxu0 0.0
    %103 = vmatprep.subr.mxu0 0.0
    %104 = vmatpush2.msra.mxu0 0.0
    %105 = vmatprep.subr.mxu0 0.0
    %106 = vmatpush2.msra.mxu0 0.0
    %107 = vmatprep.subr.mxu0 0.0
    %108 = vmatpush2.msra.mxu0 0.0
    %109 = vmatprep.subr.mxu0 0.0
    %110 = vmatpush2.msra.mxu0 0.0
    %111 = vmatprep.subr.mxu0 0.0
    %112 = vmatpush2.msra.mxu0 0.0
    %113 = vmatprep.subr.mxu0 0.0
    %114 = vmatpush2.msra.mxu0 0.0
    %115 = vmatprep.subr.mxu0 0.0
    %116 = vmatpush2.msra.mxu0 0.0
    %117 = vmatprep.subr.mxu0 0.0
    %118 = vmatpush2.msra.mxu0 0.0
    %119 = vmatprep.subr.mxu0 0.0
    %120 = vmatpush2.msra.mxu0 0.0
    %121 = vmatprep.subr.mxu0 0.0
    %122 = vmatpush2.msra.mxu0 0.0
    %123 = vmatprep.subr.mxu0 0.0
    %124 = vmatpush2.msra.mxu0 0.0
    %125 = vmatprep.subr.mxu0 0.0
    %126 = vmatpush2.msra.mxu0 0.0
    %127 = vmatprep.mubr.f32.mxu0 0.0
    %128 = vmatmul.mubr.f32.gmra.mxu0 %v58
    %v129 = vpop.f32.mrf.mxu0
    %v130 = vadd.f32 %v54, %v129
    %v131 = vpop.f32.mrf.mxu0
    %132 = vmatprep.mubr.f32.mxu0 0.0
    %133 = vmatmul.mubr.f32.gmra.mxu0 %v61
    %v134 = vpop.f32.mrf.mxu0
    %v135 = vadd.f32 %v54, %v134
    %v136 = vpop.f32.mrf.mxu0
    %137 = vdwg.mxu0
    %v138 = vtanh.pop %v130
    %v139 = vtanh.pop %v135
    %140 = vst.msk [vmem:[#allocation7] sm:$0xff] %vm56, %v138
    %141 = vst.msk [vmem:[#allocation7 + $0x8] sm:$0xff] %vm56, %v139
    // Predicated region
    $region22: #{tpu_custom_call.1} parent=1 // pred_check
      _
    $region23: #{tpu_custom_call.1} parent=1 // pred_check_branch
      %143 = sbr.rel (0) target = $region25
    $region24: #{tpu_custom_call.1} parent=1 // pred_region
      %s145 = ssub.s32 256, 256
      %146 = vsyncadd [#allocation4], %s145
      %s147 = sshll.u32 [#allocation7], 4
      %s148 = int_to_ptr.vmem [resolvable:$true] %s147
      %153 = dma.vmem_to_hbm [thread:$0]  %s148, 256, %s3, [#allocation4], 128, 128, 8
    $region25: #{tpu_custom_call.1} parent=1 // pred_fallthru
      _
    // Predicated region
    $region26: #{tpu_custom_call.1} parent=1 // pred_check
      _
    $region27: #{tpu_custom_call.1} parent=1 // pred_check_branch
      %155 = sbr.rel (0) target = $region29
    $region28: #{tpu_custom_call.1} parent=1 // pred_region
      %156 = dma.done [#allocation4], 256
    $region29: #{tpu_custom_call.1} parent=1 // pred_fallthru
      _
    %157 = vsyncpa [#allocation3], 1
    %158 = vsyncpa [#allocation6], 1
    %159 = vsyncpa [#allocation4], 1

</llo_original>
